<compile_context>
chip_gen: v7x
topology: tpu7x:2x2x1
jax: 0.10.0
libtpu: 0.0.40
codegen_flags: <defaults>
</compile_context>

<pallas_src>
import functools
import math

import jax
import jax.numpy as jnp
from jax.experimental import pallas as pl
from jax.experimental.pallas import tpu as pltpu


# ---------------------------------------------------------------------------
# Stage 1: the 3-layer MLP (latent -> hidden -> hidden -> n_nodes*hidden)
# ---------------------------------------------------------------------------
def _mlp_kernel(x_ref, w0_ref, b0_ref, w1_ref, b1_ref, w2_ref, b2_ref, out_ref):
    bf16, f32 = jnp.bfloat16, jnp.float32
    h = jnp.dot(x_ref[...].astype(bf16), w0_ref[...], preferred_element_type=f32) + b0_ref[...]
    h = jnp.maximum(h, 0.0)
    h = jnp.dot(h.astype(bf16), w1_ref[...], preferred_element_type=f32) + b1_ref[...]
    h = jnp.maximum(h, 0.0)
    out_ref[...] = jnp.dot(h.astype(bf16), w2_ref[...], preferred_element_type=f32) + b2_ref[...]


# ---------------------------------------------------------------------------
# Stage 2: GATConv (heads=1, add_self_loops) + ELU + last Linear + hard Gumbel
#          + symmetrized clamped adjacency, written lane-dense.
# ---------------------------------------------------------------------------
def _gat_head_kernel(nodes_ref, g_ref, wg_ref, asrc_ref, adst_ref, bg_ref,
                     wl_ref, bl_ref, out_ref, *, n_nodes, hidden_dim, out_width):
    bf16, f32 = jnp.bfloat16, jnp.float32
    n, hd = n_nodes, hidden_dim
    tb = nodes_ref.shape[0]

    # ---- GATConv (single head, concat=True), eval mode ----
    nodes2 = nodes_ref[...].reshape(tb * n, hd)            # lane dim unchanged -> cheap
    hg2 = jnp.dot(nodes2.astype(bf16), wg_ref[...], preferred_element_type=f32)  # lin (no bias)
    hg3 = hg2.reshape(tb, n, hd)

    a_dst = jnp.sum(hg3 * adst_ref[...], axis=-1, keepdims=True)   # (tb, n, 1) per target node
    a_src = jnp.sum(hg3 * asrc_ref[...], axis=-1)                  # (tb, n)    per source node
    e = a_dst + a_src[:, None, :]                                  # e[b, target, source]
    e = jnp.where(e >= 0.0, e, 0.2 * e)                            # leaky_relu(0.2)

    tgt = jax.lax.broadcasted_iota(jnp.int32, (tb, n, n), 1)
    src = jax.lax.broadcasted_iota(jnp.int32, (tb, n, n), 2)
    # torch.combinations edges i->j (i<j) plus self loops => target j sees sources i<=j
    e = jnp.where(src <= tgt, e, -1e30)

    e = e - jnp.max(e, axis=-1, keepdims=True)                     # per-target softmax
    p = jnp.exp(e)
    alpha = p / jnp.sum(p, axis=-1, keepdims=True)

    agg = jnp.einsum("bts,bsh->bth", alpha, hg3, preferred_element_type=f32)
    gat = agg + bg_ref[...]                                        # GATConv bias
    gat = jnp.where(gat > 0.0, gat, jnp.exp(gat) - 1.0)            # ELU
    # TODO(synk): dropout (module dropout + GAT attention dropout) omitted -- eval-mode forward.

    # ---- last linear + hard Gumbel-softmax over dim=-1 ----
    logits = jnp.dot(gat.reshape(tb * n, hd).astype(bf16), wl_ref[...],
                     preferred_element_type=f32) + bl_ref[...]
    # tau scale dropped: argmax((logits + g)/tau) == argmax(logits + g) for tau > 0.
    y = logits.reshape(tb, n, n) + g_ref[...]
    col = jax.lax.broadcasted_iota(jnp.int32, (tb, n, n), 2).astype(f32)
    is_max = y >= jnp.max(y, axis=-1, keepdims=True)
    # first-max index per row (matches torch.max tie-breaking)
    sel = jnp.min(jnp.where(is_max, col, float(n)), axis=-1)       # (tb, n), values in [0, n)

    # ---- adj = onehot + onehot^T clamped to [0,1]:  adj[b,i,j] = (sel[b,i]==j) | (sel[b,j]==i)
    # Built directly in flat lane space (lane-dense, padded to out_width) using two tiny
    # selection matmuls -- avoids any sublane->lane reshape or minor-dim transpose.
    c2 = jax.lax.broadcasted_iota(jnp.int32, (n, out_width), 1)
    r2 = jax.lax.broadcasted_iota(jnp.int32, (n, out_width), 0)
    in_range = c2 < n * n
    row_expand = jnp.where(in_range & ((c2 // n) == r2), 1.0, 0.0)  # sel[b,i] -> lane i*n+j
    col_expand = jnp.where(in_range & ((c2 % n) == r2), 1.0, 0.0)   # sel[b,j] -> lane i*n+j
    sel_i = jnp.dot(sel, row_expand, preferred_element_type=f32)    # (tb, out_width)
    sel_j = jnp.dot(sel, col_expand, preferred_element_type=f32)    # (tb, out_width)

    cf = jax.lax.broadcasted_iota(jnp.int32, (tb, out_width), 1)
    jf = (cf % n).astype(f32)
    if_ = (cf // n).astype(f32)
    hit = (sel_i == jf) | (sel_j == if_)
    out_ref[...] = jnp.where((cf < n * n) & hit, 1.0, 0.0)          # full-lane unmasked store


# ---------------------------------------------------------------------------
# Parameters (PyTorch-Linear-style init; MXU weight matrices stored bf16 once)
# ---------------------------------------------------------------------------
def make_gat_decoder_params(key, latent_dim, hidden_dim, n_layers, n_nodes,
                            n_graph_layers=1, heads=1):
    assert n_layers == 3, "kernel hardcodes the reference n_layers=3 MLP"
    assert n_graph_layers == 1 and heads == 1, "kernel hardcodes one single-head GAT layer"

    def linear(k, fan_in, fan_out):
        kw, kb = jax.random.split(k)
        bound = 1.0 / math.sqrt(fan_in)
        w = jax.random.uniform(kw, (fan_in, fan_out), jnp.float32, -bound, bound)
        b = jax.random.uniform(kb, (1, fan_out), jnp.float32, -bound, bound)
        return w.astype(jnp.bfloat16), b

    k0, k1, k2, kg, kas, kad, kl = jax.random.split(key, 7)
    w0, b0 = linear(k0, latent_dim, hidden_dim)
    w1, b1 = linear(k1, hidden_dim, hidden_dim)
    w2, b2 = linear(k2, hidden_dim, n_nodes * hidden_dim)

    bound = 1.0 / math.sqrt(hidden_dim)
    wg = jax.random.uniform(kg, (hidden_dim, hidden_dim), jnp.float32,
                            -bound, bound).astype(jnp.bfloat16)
    att_src = jax.random.uniform(kas, (1, hidden_dim), jnp.float32, -bound, bound)
    att_dst = jax.random.uniform(kad, (1, hidden_dim), jnp.float32, -bound, bound)
    bg = jnp.zeros((1, hidden_dim), jnp.float32)
    wl, bl = linear(kl, hidden_dim, n_nodes)

    return {"mlp": ((w0, b0), (w1, b1), (w2, b2)),
            "gat": (wg, att_src, att_dst, bg),
            "last": (wl, bl)}


def _pick_batch_block(batch):
    for tb in (256, 128, 64, 32, 16, 8):
        if batch % tb == 0:
            return tb
    return batch


def gat_decoder_forward(x, params, gumbel_noise, *, n_nodes, tau=1.0, batch_block=None):
    """x: (B, latent) f32.  gumbel_noise: (B, n_nodes, n_nodes) standard Gumbel samples.
    Returns the (B, n_nodes, n_nodes) clamped symmetric adjacency (eval-mode forward)."""
    del tau  # hard (argmax) Gumbel-softmax forward is invariant to tau > 0
    (w0, b0), (w1, b1), (w2, b2) = params["mlp"]
    wg, att_src, att_dst, bg = params["gat"]
    wl, bl = params["last"]

    batch, latent_dim = x.shape
    hidden_dim = w0.shape[1]
    tb = batch_block or _pick_batch_block(batch)
    assert batch % tb == 0, "batch must be divisible by the batch block"
    grid = (batch // tb,)
    parallel = pltpu.CompilerParams(dimension_semantics=("parallel",))

    def const2(shape):
        return pl.BlockSpec(shape, lambda i: (0, 0))

    # ---- stage 1: MLP, gridded over batch, weights VMEM-resident ----
    nh = n_nodes * hidden_dim
    mlp_cost = pl.CostEstimate(
        flops=2 * batch * (latent_dim * hidden_dim + hidden_dim * hidden_dim + hidden_dim * nh),
        transcendentals=0,
        bytes_accessed=4 * batch * (latent_dim + nh)
                       + 2 * hidden_dim * (latent_dim + hidden_dim + nh))
    mlp_out = pl.pallas_call(
        _mlp_kernel,
        out_shape=jax.ShapeDtypeStruct((batch, nh), jnp.float32),
        grid=grid,
        in_specs=[
            pl.BlockSpec((tb, latent_dim), lambda i: (i, 0)),
            const2((latent_dim, hidden_dim)), const2((1, hidden_dim)),
            const2((hidden_dim, hidden_dim)), const2((1, hidden_dim)),
            const2((hidden_dim, nh)), const2((1, nh)),
        ],
        out_specs=pl.BlockSpec((tb, nh), lambda i: (i, 0)),
        compiler_params=parallel,
        cost_estimate=mlp_cost,
    )(x, w0, b0, w1, b1, w2, b2)

    # Free row-major HBM reshape to node-major layout for stage 2.
    nodes = mlp_out.reshape(batch, n_nodes, hidden_dim)

    # ---- stage 2: GATConv + ELU + last linear + hard Gumbel + symmetrize ----
    out_width = max(128, ((n_nodes * n_nodes + 127) // 128) * 128)  # lane-dense padded output
    head_cost = pl.CostEstimate(
        flops=2 * batch * n_nodes * (hidden_dim * hidden_dim + n_nodes * hidden_dim
                                     + hidden_dim * n_nodes + out_width),
        transcendentals=batch * n_nodes * (n_nodes + hidden_dim),
        bytes_accessed=4 * batch * (n_nodes * hidden_dim + 2 * n_nodes * n_nodes + out_width)
                       + 2 * hidden_dim * (hidden_dim + n_nodes))
    kernel = functools.partial(_gat_head_kernel, n_nodes=n_nodes,
                               hidden_dim=hidden_dim, out_width=out_width)
    adj_flat = pl.pallas_call(
        kernel,
        out_shape=jax.ShapeDtypeStruct((batch, out_width), jnp.float32),
        grid=grid,
        in_specs=[
            pl.BlockSpec((tb, n_nodes, hidden_dim), lambda i: (i, 0, 0)),
            pl.BlockSpec((tb, n_nodes, n_nodes), lambda i: (i, 0, 0)),
            const2((hidden_dim, hidden_dim)), const2((1, hidden_dim)),
            const2((1, hidden_dim)), const2((1, hidden_dim)),
            const2((hidden_dim, n_nodes)), const2((1, n_nodes)),
        ],
        out_specs=pl.BlockSpec((tb, out_width), lambda i: (i, 0)),
        compiler_params=parallel,
        cost_estimate=head_cost,
    )(nodes, gumbel_noise, wg, att_src, att_dst, bg, wl, bl)

    return adj_flat[:, : n_nodes * n_nodes].reshape(batch, n_nodes, n_nodes)


if __name__ == "__main__":
    latent_dim, hidden_dim, n_layers, n_nodes = 32, 64, 3, 8
    batch = 16

    key = jax.random.PRNGKey(0)
    kx, kp, kg = jax.random.split(key, 3)

    x = jax.random.normal(kx, (batch, latent_dim), jnp.float32)
    params = make_gat_decoder_params(kp, latent_dim, hidden_dim, n_layers, n_nodes)
    # TODO(synk): Gumbel noise drawn on host (glue) instead of in-kernel pltpu PRNG.
    gumbel = jax.random.gumbel(kg, (batch, n_nodes, n_nodes), jnp.float32)

    adj = gat_decoder_forward(x, params, gumbel, n_nodes=n_nodes, tau=1.0, batch_block=8)
    adj = jax.block_until_ready(adj)

    # sanity: shape, symmetric, binary, every node row selects at least one edge
    assert adj.shape == (batch, n_nodes, n_nodes)
    assert bool(jnp.all(adj == jnp.swapaxes(adj, 1, 2)))
    assert bool(jnp.all((adj == 0.0) | (adj == 1.0)))
    assert bool(jnp.all(jnp.sum(adj, axis=-1) >= 1.0))

    print("KERNEL_OK")
</pallas_src>

<mosaic_0001>
module attributes {stable_mosaic.version = 11 : i64} {
  func.func @_mlp_kernel(%arg0: i32, %arg1: memref<8x32xf32, #tpu.memory_space<vmem>>, %arg2: memref<32x64xbf16, #tpu.memory_space<vmem>>, %arg3: memref<1x64xf32, #tpu.memory_space<vmem>>, %arg4: memref<64x64xbf16, #tpu.memory_space<vmem>>, %arg5: memref<1x64xf32, #tpu.memory_space<vmem>>, %arg6: memref<64x512xbf16, #tpu.memory_space<vmem>>, %arg7: memref<1x512xf32, #tpu.memory_space<vmem>>, %arg8: memref<8x512xf32, #tpu.memory_space<vmem>>) attributes {dimension_semantics = [#tpu.dimension_semantics<parallel>], iteration_bounds = array<i64: 2>, scalar_prefetch = 0 : i64, scratch_operands = 0 : i64, tpu.core_type = #tpu.core_type<tc>, window_params = [{transform_indices = @transform_0, window_bounds = array<i64: 8, 32>}, {pipeline_mode = #tpu.pipeline_mode<synchronous>, transform_indices = @transform_1, window_bounds = array<i64: 32, 64>}, {pipeline_mode = #tpu.pipeline_mode<synchronous>, transform_indices = @transform_2, window_bounds = array<i64: 1, 64>}, {pipeline_mode = #tpu.pipeline_mode<synchronous>, transform_indices = @transform_3, window_bounds = array<i64: 64, 64>}, {pipeline_mode = #tpu.pipeline_mode<synchronous>, transform_indices = @transform_4, window_bounds = array<i64: 1, 64>}, {pipeline_mode = #tpu.pipeline_mode<synchronous>, transform_indices = @transform_5, window_bounds = array<i64: 64, 512>}, {pipeline_mode = #tpu.pipeline_mode<synchronous>, transform_indices = @transform_6, window_bounds = array<i64: 1, 512>}, {transform_indices = @transform_7, window_bounds = array<i64: 8, 512>}]} {
    %c0 = arith.constant 0 : index
    %c0_0 = arith.constant 0 : index
    %0 = vector.load %arg1[%c0, %c0_0] : memref<8x32xf32, #tpu.memory_space<vmem>>, vector<8x32xf32>
    %1 = arith.truncf %0 : vector<8x32xf32> to vector<8x32xbf16>
    %c0_1 = arith.constant 0 : index
    %c0_2 = arith.constant 0 : index
    %2 = vector.load %arg2[%c0_1, %c0_2] : memref<32x64xbf16, #tpu.memory_space<vmem>>, vector<32x64xbf16>
    %cst = arith.constant dense<0.000000e+00> : vector<8x64xf32>
    %3 = tpu.matmul %1, %2, %cst {dimension_numbers = #tpu.dot_dimension_numbers<[1], [0], [0], [1], [0, 0, 1, 1], [], []>} : vector<8x32xbf16>, vector<32x64xbf16>, vector<8x64xf32> -> vector<8x64xf32>
    %c0_3 = arith.constant 0 : index
    %c0_4 = arith.constant 0 : index
    %4 = vector.load %arg3[%c0_3, %c0_4] : memref<1x64xf32, #tpu.memory_space<vmem>>, vector<1x64xf32>
    %5 = vector.broadcast %4 : vector<1x64xf32> to vector<8x64xf32>
    %6 = arith.addf %3, %5 : vector<8x64xf32>
    %cst_5 = arith.constant 0.000000e+00 : f32
    %7 = vector.broadcast %cst_5 : f32 to vector<8x64xf32>
    %8 = arith.maximumf %6, %7 : vector<8x64xf32>
    %9 = arith.truncf %8 : vector<8x64xf32> to vector<8x64xbf16>
    %c0_6 = arith.constant 0 : index
    %c0_7 = arith.constant 0 : index
    %10 = vector.load %arg4[%c0_6, %c0_7] : memref<64x64xbf16, #tpu.memory_space<vmem>>, vector<64x64xbf16>
    %cst_8 = arith.constant dense<0.000000e+00> : vector<8x64xf32>
    %11 = tpu.matmul %9, %10, %cst_8 {dimension_numbers = #tpu.dot_dimension_numbers<[1], [0], [0], [1], [0, 0, 1, 1], [], []>} : vector<8x64xbf16>, vector<64x64xbf16>, vector<8x64xf32> -> vector<8x64xf32>
    %c0_9 = arith.constant 0 : index
    %c0_10 = arith.constant 0 : index
    %12 = vector.load %arg5[%c0_9, %c0_10] : memref<1x64xf32, #tpu.memory_space<vmem>>, vector<1x64xf32>
    %13 = vector.broadcast %12 : vector<1x64xf32> to vector<8x64xf32>
    %14 = arith.addf %11, %13 : vector<8x64xf32>
    %cst_11 = arith.constant 0.000000e+00 : f32
    %15 = vector.broadcast %cst_11 : f32 to vector<8x64xf32>
    %16 = arith.maximumf %14, %15 : vector<8x64xf32>
    %17 = arith.truncf %16 : vector<8x64xf32> to vector<8x64xbf16>
    %c0_12 = arith.constant 0 : index
    %c0_13 = arith.constant 0 : index
    %18 = vector.load %arg6[%c0_12, %c0_13] : memref<64x512xbf16, #tpu.memory_space<vmem>>, vector<64x512xbf16>
    %cst_14 = arith.constant dense<0.000000e+00> : vector<8x512xf32>
    %19 = tpu.matmul %17, %18, %cst_14 {dimension_numbers = #tpu.dot_dimension_numbers<[1], [0], [0], [1], [0, 0, 1, 1], [], []>} : vector<8x64xbf16>, vector<64x512xbf16>, vector<8x512xf32> -> vector<8x512xf32>
    %c0_15 = arith.constant 0 : index
    %c0_16 = arith.constant 0 : index
    %20 = vector.load %arg7[%c0_15, %c0_16] : memref<1x512xf32, #tpu.memory_space<vmem>>, vector<1x512xf32>
    %21 = vector.broadcast %20 : vector<1x512xf32> to vector<8x512xf32>
    %22 = arith.addf %19, %21 : vector<8x512xf32>
    %c0_17 = arith.constant 0 : index
    %c0_18 = arith.constant 0 : index
    %23 = vector.load %arg8[%c0_17, %c0_18] : memref<8x512xf32, #tpu.memory_space<vmem>>, vector<8x512xf32>
    tpu.vector_store %arg8[%c0_17, %c0_18], %22 {strides = array<i32>} : memref<8x512xf32, #tpu.memory_space<vmem>>, vector<8x512xf32>,
    return
  }
  func.func @transform_0(%arg0: i32) -> (i32, i32) {
    %c0_i32 = arith.constant 0 : i32
    %c0_i32_0 = arith.constant 0 : i32
    return %arg0, %c0_i32 : i32, i32
  }
  func.func @transform_1(%arg0: i32) -> (i32, i32) {
    %c0_i32 = arith.constant 0 : i32
    %c0_i32_0 = arith.constant 0 : i32
    %c0_i32_1 = arith.constant 0 : i32
    return %c0_i32, %c0_i32_0 : i32, i32
  }
  func.func @transform_2(%arg0: i32) -> (i32, i32) {
    %c0_i32 = arith.constant 0 : i32
    %c0_i32_0 = arith.constant 0 : i32
    %c0_i32_1 = arith.constant 0 : i32
    return %c0_i32, %c0_i32_0 : i32, i32
  }
  func.func @transform_3(%arg0: i32) -> (i32, i32) {
    %c0_i32 = arith.constant 0 : i32
    %c0_i32_0 = arith.constant 0 : i32
    %c0_i32_1 = arith.constant 0 : i32
    return %c0_i32, %c0_i32_0 : i32, i32
  }
  func.func @transform_4(%arg0: i32) -> (i32, i32) {
    %c0_i32 = arith.constant 0 : i32
    %c0_i32_0 = arith.constant 0 : i32
    %c0_i32_1 = arith.constant 0 : i32
    return %c0_i32, %c0_i32_0 : i32, i32
  }
  func.func @transform_5(%arg0: i32) -> (i32, i32) {
    %c0_i32 = arith.constant 0 : i32
    %c0_i32_0 = arith.constant 0 : i32
    %c0_i32_1 = arith.constant 0 : i32
    return %c0_i32, %c0_i32_0 : i32, i32
  }
  func.func @transform_6(%arg0: i32) -> (i32, i32) {
    %c0_i32 = arith.constant 0 : i32
    %c0_i32_0 = arith.constant 0 : i32
    %c0_i32_1 = arith.constant 0 : i32
    return %c0_i32, %c0_i32_0 : i32, i32
  }
  func.func @transform_7(%arg0: i32) -> (i32, i32) {
    %c0_i32 = arith.constant 0 : i32
    %c0_i32_0 = arith.constant 0 : i32
    return %arg0, %c0_i32 : i32, i32
  }
}

</mosaic_0001>

<llo_original>
// kernel: tpu_custom_call.1
$region0: #{tpu_custom_call.1}
  #allocation0 [shape = 'u32[]', space=smem, size = 0x4, offset = 0x4, fixed_abs, tag = 'smem constant byte address 0x4 - core index']
  #allocation1 [shape = 'u32[144,128]{1,0:T(1,128)}', space=vmem, size = 0x12000, scoped, tag = 'internal scratch']
  %s0 = inlined_call_operand.hbm [shape: f32[16,32], index: 0, kind: input, shape index: {}]
  %s1 = inlined_call_operand.hbm [shape: bf16[32,64], index: 1, kind: input, shape index: {}]
  %s2 = inlined_call_operand.vmem [shape: f32[1,64], index: 2, kind: input, shape index: {}]
  %s3 = inlined_call_operand.hbm [shape: bf16[64,64], index: 3, kind: input, shape index: {}]
  %s4 = inlined_call_operand.vmem [shape: f32[1,64], index: 4, kind: input, shape index: {}]
  %s5 = inlined_call_operand.hbm [shape: bf16[64,512], index: 5, kind: input, shape index: {}]
  %s6 = inlined_call_operand.vmem [shape: f32[1,512], index: 6, kind: input, shape index: {}]
  %s7 = inlined_call_operand.hbm [shape: f32[16,512], index: 7, kind: output, shape index: {}]
  %s8 = sld [smem:[#allocation0]]
  $region77: #{tpu_custom_call.1} parent=0
    _
  %s10 = ssub.s32 1, %s8
  %s11 = scalar_select 0, %s10, %s8
  $region1: #{tpu_custom_call.1} parent=0
    #allocation2 [shape = 'u8[8192]{0}', space=vmem, size = 0x2000, scoped, tag = 'input window, operand 0']
    #allocation3 [shape = 's32[2]{0}', space=sflag, size = 0x8, scoped, tag = 'scoped memory for tpu_custom_call.1']
    #allocation4 [shape = 's32[2]{0}', space=sflag, size = 0x8, scoped, tag = 'scoped memory for tpu_custom_call.1']
    #allocation5 [shape = 'u8[8192]{0}', space=vmem, size = 0x2000, scoped, tag = 'input window, operand 1, single buffered']
    #allocation6 [shape = 's32[1]{0}', space=sflag, size = 0x4, scoped, tag = 'scoped memory for tpu_custom_call.1']
    #allocation7 [shape = 'u8[16384]{0}', space=vmem, size = 0x4000, scoped, tag = 'input window, operand 3, single buffered']
    #allocation8 [shape = 'u8[65536]{0}', space=vmem, size = 0x10000, scoped, tag = 'input window, operand 5, single buffered']
    #allocation9 [shape = 's32[1]{0}', space=sflag, size = 0x4, scoped, tag = 'scoped memory for tpu_custom_call.1']
    #allocation10 [shape = 'u8[32768]{0}', space=vmem, size = 0x8000, scoped, tag = 'output window, operand 0']
    %12 = vsyncpa [#allocation3], 0
    %s13 = scalar_lea.sflag [#allocation3], 1
    %14 = vsyncpa %s13, 0
    %15 = vsyncpa [#allocation6], 0
    %16 = vsyncpa [#allocation9], 0
    %17 = vsyncpa [#allocation4], 0
    %s18 = scalar_lea.sflag [#allocation4], 1
    %19 = vsyncpa %s18, 0
    loop: start=0, step=1, limit=4
    $region2: #{tpu_custom_call.1} parent=1 // loop_pre_header
      _
    $region3: #{tpu_custom_call.1} parent=1 // loop_header
      %s21 = sphi 0, %s25
      %p22 = scmp.ge.s32.totalorder %s21, 4
      %s31 = sphi 0, %s33
      %s34 = sphi 0, %s31
      %s35 = sphi 0, %s34
      %s51 = sphi 0, %s35
      %s55 = sphi 0, %s55
      %s57 = sphi 0, %s55
      %s58 = sphi 0, %s57
      %s72 = sphi 0, %s58
      %s76 = sphi 0, %s76
      %s78 = sphi 0, %s76
      %s79 = sphi 0, %s78
      %s93 = sphi 0, %s79
      %s97 = sphi 0, %s97
      %s99 = sphi 0, %s97
      %s100 = sphi 0, %s99
      %s114 = sphi 0, %s100
      %s118 = sphi 0, %s118
      %s120 = sphi 0, %s118
      %s121 = sphi 0, %s120
      %s135 = sphi 0, %s121
      %s139 = sphi 0, %s139
      %s141 = sphi 0, %s139
      %s142 = sphi 0, %s141
      %s156 = sphi 0, %s142
      %s160 = sphi 0, %s160
      %s162 = sphi 0, %s160
      %s163 = sphi 0, %s162
      %s177 = sphi 0, %s163
      %s183 = sphi 0, %s185
      %s186 = sphi 0, %s183
      %s187 = sphi 0, %s186
      %s203 = sphi 0, %s187
    $region4: #{tpu_custom_call.1} parent=1 // loop_header_branch
      %24 = sbr.rel (%p22) target = $region8
    $region5: #{tpu_custom_call.1} parent=1 // loop_body
      %s26 = ssub.s32 %s21, 1
      %s27 = ssub.s32 %s21, 2
      %s28 = sadd.s32 %s21, 1
      %s29 = ssub.s32 %s21, %s28
      %p30 = scmp.eq.s32.totalorder %s29, 0
      %s32 = sadd.s32 %s31, 1
      %s33 = scalar_select %p30, %s31, %s32
      %p36 = pneg %p30
      %p37 = scmp.eq.s32.totalorder %s21, 1
      %p38 = por %p36, %p37
      %p39 = scmp.ne.s32.totalorder %s31, %s34
      %p40 = scmp.eq.s32.totalorder %s21, 0
      %p41 = por %p39, %p40
      %p42 = scmp.ne.s32.totalorder %s31, %s34
      %p43 = scmp.eq.s32.totalorder %s26, 1
      %p44 = por %p42, %p43
      %p45 = scmp.ne.s32.totalorder %s34, %s35
      %p46 = scmp.eq.s32.totalorder %s26, 0
      %p47 = por %p45, %p46
      %p48 = scmp.ne.s32.totalorder %s34, %s35
      %p49 = scmp.eq.s32.totalorder %s27, 1
      %p50 = por %p48, %p49
      %p52 = scmp.ne.s32.totalorder %s35, %s51
      %p53 = scmp.eq.s32.totalorder %s27, 0
      %p54 = por %p52, %p53
      %s56 = sadd.s32 %s55, 1
      %p59 = scmp.eq.s32.totalorder %s21, 1
      %p60 = scmp.ne.s32.totalorder %s55, %s57
      %p61 = scmp.eq.s32.totalorder %s21, 0
      %p62 = por %p60, %p61
      %p63 = scmp.ne.s32.totalorder %s55, %s57
      %p64 = scmp.eq.s32.totalorder %s26, 1
      %p65 = por %p63, %p64
      %p66 = scmp.ne.s32.totalorder %s57, %s58
      %p67 = scmp.eq.s32.totalorder %s26, 0
      %p68 = por %p66, %p67
      %p69 = scmp.ne.s32.totalorder %s57, %s58
      %p70 = scmp.eq.s32.totalorder %s27, 1
      %p71 = por %p69, %p70
      %p73 = scmp.ne.s32.totalorder %s58, %s72
      %p74 = scmp.eq.s32.totalorder %s27, 0
      %p75 = por %p73, %p74
      %s77 = sadd.s32 %s76, 1
      %p80 = scmp.eq.s32.totalorder %s21, 1
      %p81 = scmp.ne.s32.totalorder %s76, %s78
      %p82 = scmp.eq.s32.totalorder %s21, 0
      %p83 = por %p81, %p82
      %p84 = scmp.ne.s32.totalorder %s76, %s78
      %p85 = scmp.eq.s32.totalorder %s26, 1
      %p86 = por %p84, %p85
      %p87 = scmp.ne.s32.totalorder %s78, %s79
      %p88 = scmp.eq.s32.totalorder %s26, 0
      %p89 = por %p87, %p88
      %p90 = scmp.ne.s32.totalorder %s78, %s79
      %p91 = scmp.eq.s32.totalorder %s27, 1
      %p92 = por %p90, %p91
      %p94 = scmp.ne.s32.totalorder %s79, %s93
      %p95 = scmp.eq.s32.totalorder %s27, 0
      %p96 = por %p94, %p95
      %s98 = sadd.s32 %s97, 1
      %p101 = scmp.eq.s32.totalorder %s21, 1
      %p102 = scmp.ne.s32.totalorder %s97, %s99
      %p103 = scmp.eq.s32.totalorder %s21, 0
      %p104 = por %p102, %p103
      %p105 = scmp.ne.s32.totalorder %s97, %s99
      %p106 = scmp.eq.s32.totalorder %s26, 1
      %p107 = por %p105, %p106
      %p108 = scmp.ne.s32.totalorder %s99, %s100
      %p109 = scmp.eq.s32.totalorder %s26, 0
      %p110 = por %p108, %p109
      %p111 = scmp.ne.s32.totalorder %s99, %s100
      %p112 = scmp.eq.s32.totalorder %s27, 1
      %p113 = por %p111, %p112
      %p115 = scmp.ne.s32.totalorder %s100, %s114
      %p116 = scmp.eq.s32.totalorder %s27, 0
      %p117 = por %p115, %p116
      %s119 = sadd.s32 %s118, 1
      %p122 = scmp.eq.s32.totalorder %s21, 1
      %p123 = scmp.ne.s32.totalorder %s118, %s120
      %p124 = scmp.eq.s32.totalorder %s21, 0
      %p125 = por %p123, %p124
      %p126 = scmp.ne.s32.totalorder %s118, %s120
      %p127 = scmp.eq.s32.totalorder %s26, 1
      %p128 = por %p126, %p127
      %p129 = scmp.ne.s32.totalorder %s120, %s121
      %p130 = scmp.eq.s32.totalorder %s26, 0
      %p131 = por %p129, %p130
      %p132 = scmp.ne.s32.totalorder %s120, %s121
      %p133 = scmp.eq.s32.totalorder %s27, 1
      %p134 = por %p132, %p133
      %p136 = scmp.ne.s32.totalorder %s121, %s135
      %p137 = scmp.eq.s32.totalorder %s27, 0
      %p138 = por %p136, %p137
      %s140 = sadd.s32 %s139, 1
      %p143 = scmp.eq.s32.totalorder %s21, 1
      %p144 = scmp.ne.s32.totalorder %s139, %s141
      %p145 = scmp.eq.s32.totalorder %s21, 0
      %p146 = por %p144, %p145
      %p147 = scmp.ne.s32.totalorder %s139, %s141
      %p148 = scmp.eq.s32.totalorder %s26, 1
      %p149 = por %p147, %p148
      %p150 = scmp.ne.s32.totalorder %s141, %s142
      %p151 = scmp.eq.s32.totalorder %s26, 0
      %p152 = por %p150, %p151
      %p153 = scmp.ne.s32.totalorder %s141, %s142
      %p154 = scmp.eq.s32.totalorder %s27, 1
      %p155 = por %p153, %p154
      %p157 = scmp.ne.s32.totalorder %s142, %s156
      %p158 = scmp.eq.s32.totalorder %s27, 0
      %p159 = por %p157, %p158
      %s161 = sadd.s32 %s160, 1
      %p164 = scmp.eq.s32.totalorder %s21, 1
      %p165 = scmp.ne.s32.totalorder %s160, %s162
      %p166 = scmp.eq.s32.totalorder %s21, 0
      %p167 = por %p165, %p166
      %p168 = scmp.ne.s32.totalorder %s160, %s162
      %p169 = scmp.eq.s32.totalorder %s26, 1
      %p170 = por %p168, %p169
      %p171 = scmp.ne.s32.totalorder %s162, %s163
      %p172 = scmp.eq.s32.totalorder %s26, 0
      %p173 = por %p171, %p172
      %p174 = scmp.ne.s32.totalorder %s162, %s163
      %p175 = scmp.eq.s32.totalorder %s27, 1
      %p176 = por %p174, %p175
      %p178 = scmp.ne.s32.totalorder %s163, %s177
      %p179 = scmp.eq.s32.totalorder %s27, 0
      %p180 = por %p178, %p179
      %s181 = ssub.s32 %s21, %s28
      %p182 = scmp.eq.s32.totalorder %s181, 0
      %s184 = sadd.s32 %s183, 1
      %s185 = scalar_select %p182, %s183, %s184
      %p188 = pneg %p182
      %p189 = scmp.eq.s32.totalorder %s21, 1
      %p190 = por %p188, %p189
      %p191 = scmp.ne.s32.totalorder %s183, %s186
      %p192 = scmp.eq.s32.totalorder %s21, 0
      %p193 = por %p191, %p192
      %p194 = scmp.ne.s32.totalorder %s183, %s186
      %p195 = scmp.eq.s32.totalorder %s26, 1
      %p196 = por %p194, %p195
      %p197 = scmp.ne.s32.totalorder %s186, %s187
      %p198 = scmp.eq.s32.totalorder %s26, 0
      %p199 = por %p197, %p198
      %p200 = scmp.ne.s32.totalorder %s186, %s187
      %p201 = scmp.eq.s32.totalorder %s27, 1
      %p202 = por %p200, %p201
      %p204 = scmp.ne.s32.totalorder %s187, %s203
      %p205 = scmp.eq.s32.totalorder %s27, 0
      %p206 = por %p204, %p205
      %p207 = scmp.le.s32.totalorder 1, %s21
      %p208 = scmp.lt.s32.totalorder %s21, 3
      %p209 = pnand %p207, %p208
      %p210 = pneg %p209
      // Predicated region
      $region9: #{tpu_custom_call.1} parent=5 // pred_check
        _
      $region10: #{tpu_custom_call.1} parent=5 // pred_check_branch
        %212 = sbr.rel (%p209) target = $region12
      $region11: #{tpu_custom_call.1} parent=5 // pred_region
        %s213 = ssub.s32 %s21, 1
        // Predicated region
        $region13: #{tpu_custom_call.1} parent=11 // pred_check
          %p214 = pneg %p68
        $region14: #{tpu_custom_call.1} parent=11 // pred_check_branch
          %216 = sbr.rel (%p214) target = $region16
        $region15: #{tpu_custom_call.1} parent=11 // pred_region
          %s218 = ssub.s32 256, 256
          %219 = vsyncadd [#allocation6], %s218
          %s220 = sshll.u32 [#allocation5], 4
          %s221 = int_to_ptr.vmem [resolvable:$true] %s220
          %226 = dma.hbm_to_vmem [thread:$0]  %s1, 256, %s221, [#allocation6], 64, 64, 4
        $region16: #{tpu_custom_call.1} parent=11 // pred_fallthru
          _
        // Predicated region
        $region17: #{tpu_custom_call.1} parent=11 // pred_check
          %p227 = pneg %p89
        $region18: #{tpu_custom_call.1} parent=11 // pred_check_branch
          %229 = sbr.rel (%p227) target = $region20
        $region19: #{tpu_custom_call.1} parent=11 // pred_region
          _
        $region20: #{tpu_custom_call.1} parent=11 // pred_fallthru
          _
        // Predicated region
        $region21: #{tpu_custom_call.1} parent=11 // pred_check
          %p230 = pneg %p110
        $region22: #{tpu_custom_call.1} parent=11 // pred_check_branch
          %232 = sbr.rel (%p230) target = $region24
        $region23: #{tpu_custom_call.1} parent=11 // pred_region
          %s234 = ssub.s32 512, 512
          %235 = vsyncadd [#allocation6], %s234
          %s236 = sshll.u32 [#allocation7], 4
          %s237 = int_to_ptr.vmem [resolvable:$true] %s236
          %242 = dma.hbm_to_vmem [thread:$0]  %s3, 512, %s237, [#allocation6], 64, 64, 4
        $region24: #{tpu_custom_call.1} parent=11 // pred_fallthru
          _
        // Predicated region
        $region25: #{tpu_custom_call.1} parent=11 // pred_check
          %p243 = pneg %p131
        $region26: #{tpu_custom_call.1} parent=11 // pred_check_branch
          %245 = sbr.rel (%p243) target = $region28
        $region27: #{tpu_custom_call.1} parent=11 // pred_region
          _
        $region28: #{tpu_custom_call.1} parent=11 // pred_fallthru
          _
        // Predicated region
        $region29: #{tpu_custom_call.1} parent=11 // pred_check
          %p246 = pneg %p152
        $region30: #{tpu_custom_call.1} parent=11 // pred_check_branch
          %248 = sbr.rel (%p246) target = $region32
        $region31: #{tpu_custom_call.1} parent=11 // pred_region
          %s250 = ssub.s32 2048, 2048
          %251 = vsyncadd [#allocation9], %s250
          %s252 = sshll.u32 [#allocation8], 4
          %s253 = int_to_ptr.vmem [resolvable:$true] %s252
          %258 = dma.hbm_to_vmem [thread:$0]  %s5, 2048, %s253, [#allocation9], 256, 256, 16
        $region32: #{tpu_custom_call.1} parent=11 // pred_fallthru
          _
        // Predicated region
        $region33: #{tpu_custom_call.1} parent=11 // pred_check
          %p259 = pneg %p173
        $region34: #{tpu_custom_call.1} parent=11 // pred_check_branch
          %261 = sbr.rel (%p259) target = $region36
        $region35: #{tpu_custom_call.1} parent=11 // pred_region
          _
        $region36: #{tpu_custom_call.1} parent=11 // pred_fallthru
          _
      $region12: #{tpu_custom_call.1} parent=5 // pred_fallthru
        _
      %p262 = scmp.lt.s32.totalorder %s21, 2
      // Predicated region
      $region37: #{tpu_custom_call.1} parent=5 // pred_check
        %p263 = pneg %p262
      $region38: #{tpu_custom_call.1} parent=5 // pred_check_branch
        %265 = sbr.rel (%p263) target = $region40
      $region39: #{tpu_custom_call.1} parent=5 // pred_region
        // Predicated region
        $region41: #{tpu_custom_call.1} parent=39 // pred_check
          %p266 = pneg %p41
        $region42: #{tpu_custom_call.1} parent=39 // pred_check_branch
          %268 = sbr.rel (%p266) target = $region44
        $region43: #{tpu_custom_call.1} parent=39 // pred_region
          %s269 = sand.u32 %s31, 1
          %s270 = scalar_lea.sflag [#allocation3], %s269
          %s271 = sand.u32 %s31, 1
          %s272 = smul.addr %s271, 8
          %s273 = scalar_lea.vmem [#allocation2], %s272
          %s275 = ssub.s32 128, 128
          %276 = vsyncadd %s270, %s275
          %s277 = smul.addr %s21, 128
          %s278 = scalar_lea.hbm %s0, %s277
          %s280 = sshll.u32 %s273, 4
          %s281 = int_to_ptr.vmem [resolvable:$true] %s280
          %283 = dma.hbm_to_vmem [thread:$0]  %s278, 128, %s281, %s270
        $region44: #{tpu_custom_call.1} parent=39 // pred_fallthru
          _
      $region40: #{tpu_custom_call.1} parent=5 // pred_fallthru
        _
      %p284 = scmp.le.s32.totalorder 1, %s21
      %p285 = scmp.lt.s32.totalorder %s21, 3
      %p286 = pnand %p284, %p285
      %p287 = pneg %p286
      // Predicated region
      $region45: #{tpu_custom_call.1} parent=5 // pred_check
        _
      $region46: #{tpu_custom_call.1} parent=5 // pred_check_branch
        %289 = sbr.rel (%p286) target = $region48
      $region47: #{tpu_custom_call.1} parent=5 // pred_region
        %s290 = ssub.s32 %s21, 1
        %s291 = sand.u32 %s34, 1
        %s292 = scalar_lea.sflag [#allocation3], %s291
        %s293 = sand.u32 %s34, 1
        %s294 = smul.addr %s293, 8
        %s295 = scalar_lea.vmem [#allocation2], %s294
        // Predicated region
        $region49: #{tpu_custom_call.1} parent=47 // pred_check
          %p296 = pneg %p47
        $region50: #{tpu_custom_call.1} parent=47 // pred_check_branch
          %298 = sbr.rel (%p296) target = $region52
        $region51: #{tpu_custom_call.1} parent=47 // pred_region
          %299 = dma.done %s292, 128
        $region52: #{tpu_custom_call.1} parent=47 // pred_fallthru
          _
        // Predicated region
        $region53: #{tpu_custom_call.1} parent=47 // pred_check
          %p300 = pneg %p68
        $region54: #{tpu_custom_call.1} parent=47 // pred_check_branch
          %302 = sbr.rel (%p300) target = $region56
        $region55: #{tpu_custom_call.1} parent=47 // pred_region
          %303 = dma.done [#allocation6], 256
        $region56: #{tpu_custom_call.1} parent=47 // pred_fallthru
          _
        // Predicated region
        $region57: #{tpu_custom_call.1} parent=47 // pred_check
          %p304 = pneg %p110
        $region58: #{tpu_custom_call.1} parent=47 // pred_check_branch
          %306 = sbr.rel (%p304) target = $region60
        $region59: #{tpu_custom_call.1} parent=47 // pred_region
          %307 = dma.done [#allocation6], 512
        $region60: #{tpu_custom_call.1} parent=47 // pred_fallthru
          _
        // Predicated region
        $region61: #{tpu_custom_call.1} parent=47 // pred_check
          %p308 = pneg %p152
        $region62: #{tpu_custom_call.1} parent=47 // pred_check_branch
          %310 = sbr.rel (%p308) target = $region64
        $region63: #{tpu_custom_call.1} parent=47 // pred_region
          %311 = dma.done [#allocation9], 2048
        $region64: #{tpu_custom_call.1} parent=47 // pred_fallthru
          _
        %s312 = sand.u32 %s34, 1
        %s313 = scalar_lea.sflag [#allocation3], %s312
        %s314 = sand.u32 %s34, 1
        %s315 = smul.addr %s314, 8
        %s316 = scalar_lea.vmem [#allocation2], %s315
        %p317 = pneg %p47
        %p318 = pneg %p44
        %p319 = pneg %p68
        %p320 = pneg %p65
        %p321 = pneg %p89
        %p322 = pneg %p86
        %p323 = pneg %p110
        %p324 = pneg %p107
        %p325 = pneg %p131
        %p326 = pneg %p128
        %p327 = pneg %p152
        %p328 = pneg %p149
        %p329 = pneg %p173
        %p330 = pneg %p170
        %p331 = pneg %p199
        %p332 = pneg %p196
        %s333 = sand.u32 %s186, 1
        %s334 = scalar_lea.sflag [#allocation4], %s333
        %s335 = sand.u32 %s186, 1
        %s336 = smul.addr %s335, 32
        %s337 = scalar_lea.vmem [#allocation10], %s336
        %v339 = vld [vmem:[%s295] sm:$0xff]
        %v340 = vpack.c.bf16 %v339, %v339
        %v341 = vld [vmem:[#allocation5] sm:$0xf]
        %v342 = vld [vmem:[#allocation5 + $0x4] sm:$0xf]
        %v343 = vld [vmem:[#allocation5 + $0x8] sm:$0xf]
        %v344 = vld [vmem:[#allocation5 + $0xc] sm:$0xf]
        %v345 = vld [vmem:[%s2] sm:$0x1]
        %v347 = vlaneseq
        %v348 = vshrl.u32 %v347, 7
        %v349 = vsub.s32 0, %v348
        %v350 = vrot.slane %v345, %v349
        %v356 = vunpack.c.l.b16 %v341
        %v357 = vunpack.c.l.b16 %v342
        %v358 = vunpack.c.l.b16 %v343
        %v359 = vunpack.c.l.b16 %v344
        %v360 = vpack.c.b16 %v357, %v356
        %v361 = vpack.c.b16 %v359, %v358
        %vm364 = vcmask 261120
        %v366 = vsel %vm364, %v340, 0
        %368 = vmatprep.subr.bf16.mxu0 0
        %369 = vmatpush1.bf16.msra.mxu0 %v360
        %370 = vmatprep.subr.bf16.mxu0 0
        %371 = vmatpush1.bf16.msra.mxu0 %v361
        %372 = vmatprep.subr.bf16.mxu0 0
        %373 = vmatpush1.bf16.msra.mxu0 0
        %374 = vmatprep.subr.bf16.mxu0 0
        %375 = vmatpush1.bf16.msra.mxu0 0
        %376 = vmatprep.subr.bf16.mxu0 0
        %377 = vmatpush1.bf16.msra.mxu0 0
        %378 = vmatprep.subr.bf16.mxu0 0
        %379 = vmatpush1.bf16.msra.mxu0 0
        %380 = vmatprep.subr.bf16.mxu0 0
        %381 = vmatpush1.bf16.msra.mxu0 0
        %382 = vmatprep.subr.bf16.mxu0 0
        %383 = vmatpush1.bf16.msra.mxu0 0
        %384 = vmatprep.subr.bf16.mxu0 0
        %385 = vmatpush1.bf16.msra.mxu0 0
        %386 = vmatprep.subr.bf16.mxu0 0
        %387 = vmatpush1.bf16.msra.mxu0 0
        %388 = vmatprep.subr.bf16.mxu0 0
        %389 = vmatpush1.bf16.msra.mxu0 0
        %390 = vmatprep.subr.bf16.mxu0 0
        %391 = vmatpush1.bf16.msra.mxu0 0
        %392 = vmatprep.subr.bf16.mxu0 0
        %393 = vmatpush1.bf16.msra.mxu0 0
        %394 = vmatprep.subr.bf16.mxu0 0
        %395 = vmatpush1.bf16.msra.mxu0 0
        %396 = vmatprep.subr.bf16.mxu0 0
        %397 = vmatpush1.bf16.msra.mxu0 0
        %398 = vmatprep.subr.bf16.mxu0 0
        %399 = vmatpush1.bf16.msra.mxu0 0
        %400 = vmatprep.mubr.bf16.mxu0 0
        %401 = vmatmul.mubr.bf16.gmra.mrb[0].mxu0 %v366
        %v402 = vpop.f32.mrb[0].mxu0
        %v403 = vadd.f32 %v350, %v402
        %v404 = vpop.f32.mrb[0].mxu0
        %v405 = vpop.f32.mrb[0].mxu0
        %v406 = vpop.f32.mrb[0].mxu0
        %407 = vdwg.mxu0
        %v408 = vmax.f32 %v403, 0.0
        %v409 = vpack.c.bf16 %v408, %v408
        %v410 = vld [vmem:[#allocation7] sm:$0xf]
        %v411 = vld [vmem:[#allocation7 + $0x4] sm:$0xf]
        %v412 = vld [vmem:[#allocation7 + $0x8] sm:$0xf]
        %v413 = vld [vmem:[#allocation7 + $0xc] sm:$0xf]
        %v414 = vld [vmem:[#allocation7 + $0x10] sm:$0xf]
        %v415 = vld [vmem:[#allocation7 + $0x14] sm:$0xf]
        %v416 = vld [vmem:[#allocation7 + $0x18] sm:$0xf]
        %v417 = vld [vmem:[#allocation7 + $0x1c] sm:$0xf]
        %v418 = vld [vmem:[%s4] sm:$0x1]
        %v420 = vlaneseq
        %v421 = vshrl.u32 %v420, 7
        %v422 = vsub.s32 0, %v421
        %v423 = vrot.slane %v418, %v422
        %v433 = vunpack.c.l.b16 %v410
        %v434 = vunpack.c.l.b16 %v411
        %v435 = vunpack.c.l.b16 %v412
        %v436 = vunpack.c.l.b16 %v413
        %v437 = vunpack.c.l.b16 %v414
        %v438 = vunpack.c.l.b16 %v415
        %v439 = vunpack.c.l.b16 %v416
        %v440 = vunpack.c.l.b16 %v417
        %v441 = vpack.c.b16 %v434, %v433
        %v442 = vpack.c.b16 %v436, %v435
        %v443 = vpack.c.b16 %v438, %v437
        %v444 = vpack.c.b16 %v440, %v439
        %vm449 = vcmask 523264
        %v451 = vsel %vm449, %v409, 0
        %453 = vmatprep.subr.bf16.mxu0 0
        %454 = vmatpush1.bf16.msra.mxu0 %v441
        %455 = vmatprep.subr.bf16.mxu0 0
        %456 = vmatpush1.bf16.msra.mxu0 %v442
        %457 = vmatprep.subr.bf16.mxu0 0
        %458 = vmatpush1.bf16.msra.mxu0 %v443
        %459 = vmatprep.subr.bf16.mxu0 0
        %460 = vmatpush1.bf16.msra.mxu0 %v444
        %461 = vmatprep.subr.bf16.mxu0 0
        %462 = vmatpush1.bf16.msra.mxu0 0
        %463 = vmatprep.subr.bf16.mxu0 0
        %464 = vmatpush1.bf16.msra.mxu0 0
        %465 = vmatprep.subr.bf16.mxu0 0
        %466 = vmatpush1.bf16.msra.mxu0 0
        %467 = vmatprep.subr.bf16.mxu0 0
        %468 = vmatpush1.bf16.msra.mxu0 0
        %469 = vmatprep.subr.bf16.mxu0 0
        %470 = vmatpush1.bf16.msra.mxu0 0
        %471 = vmatprep.subr.bf16.mxu0 0
        %472 = vmatpush1.bf16.msra.mxu0 0
        %473 = vmatprep.subr.bf16.mxu0 0
        %474 = vmatpush1.bf16.msra.mxu0 0
        %475 = vmatprep.subr.bf16.mxu0 0
        %476 = vmatpush1.bf16.msra.mxu0 0
        %477 = vmatprep.subr.bf16.mxu0 0
        %478 = vmatpush1.bf16.msra.mxu0 0
        %479 = vmatprep.subr.bf16.mxu0 0
        %480 = vmatpush1.bf16.msra.mxu0 0
        %481 = vmatprep.subr.bf16.mxu0 0
        %482 = vmatpush1.bf16.msra.mxu0 0
        %483 = vmatprep.subr.bf16.mxu0 0
        %484 = vmatpush1.bf16.msra.mxu0 0
        %485 = vmatprep.mubr.bf16.mxu0 0
        %486 = vmatmul.mubr.bf16.gmra.mrb[0].mxu0 %v451
        %v487 = vpop.f32.mrb[0].mxu0
        %v488 = vadd.f32 %v423, %v487
        %v489 = vpop.f32.mrb[0].mxu0
        %v490 = vpop.f32.mrb[0].mxu0
        %v491 = vpop.f32.mrb[0].mxu0
        %492 = vdwg.mxu0
        %v493 = vmax.f32 %v488, 0.0
        %v494 = vpack.c.bf16 %v493, %v493
        %v495 = vld [vmem:[#allocation8] sm:$0xff]
        %v496 = vld [vmem:[#allocation8 + $0x8] sm:$0xff]
        %v497 = vld [vmem:[#allocation8 + $0x10] sm:$0xff]
        %v498 = vld [vmem:[#allocation8 + $0x18] sm:$0xff]
        %v499 = vld [vmem:[#allocation8 + $0x20] sm:$0xff]
        %v500 = vld [vmem:[#allocation8 + $0x28] sm:$0xff]
        %v501 = vld [vmem:[#allocation8 + $0x30] sm:$0xff]
        %v502 = vld [vmem:[#allocation8 + $0x38] sm:$0xff]
        %v503 = vld [vmem:[#allocation8 + $0x40] sm:$0xff]
        %v504 = vld [vmem:[#allocation8 + $0x48] sm:$0xff]
        %v505 = vld [vmem:[#allocation8 + $0x50] sm:$0xff]
        %v506 = vld [vmem:[#allocation8 + $0x58] sm:$0xff]
        %v507 = vld [vmem:[#allocation8 + $0x60] sm:$0xff]
        %v508 = vld [vmem:[#allocation8 + $0x68] sm:$0xff]
        %v509 = vld [vmem:[#allocation8 + $0x70] sm:$0xff]
        %v510 = vld [vmem:[#allocation8 + $0x78] sm:$0xff]
        %v511 = vld [vmem:[%s6] sm:$0xf]
        %v513 = vlaneseq
        %v514 = vshrl.u32 %v513, 7
        %v515 = vsub.s32 0, %v514
        %v516 = vrot.slane %v511, %v515
        %v517 = vlaneseq
        %v518 = vshrl.u32 %v517, 7
        %v519 = vsub.s32 1, %v518
        %v520 = vrot.slane %v511, %v519
        %v521 = vlaneseq
        %v522 = vshrl.u32 %v521, 7
        %v523 = vsub.s32 2, %v522
        %v524 = vrot.slane %v511, %v523
        %v525 = vlaneseq
        %v526 = vshrl.u32 %v525, 7
        %v527 = vsub.s32 3, %v526
        %v528 = vrot.slane %v511, %v527
        %v549 = vunpack.c.l.b16 %v495
        %v550 = vunpack.c.h.b16 %v495
        %v551 = vunpack.c.l.b16 %v496
        %v552 = vunpack.c.h.b16 %v496
        %v553 = vunpack.c.l.b16 %v497
        %v554 = vunpack.c.h.b16 %v497
        %v555 = vunpack.c.l.b16 %v498
        %v556 = vunpack.c.h.b16 %v498
        %v557 = vunpack.c.l.b16 %v499
        %v558 = vunpack.c.h.b16 %v499
        %v559 = vunpack.c.l.b16 %v500
        %v560 = vunpack.c.h.b16 %v500
        %v561 = vunpack.c.l.b16 %v501
        %v562 = vunpack.c.h.b16 %v501
        %v563 = vunpack.c.l.b16 %v502
        %v564 = vunpack.c.h.b16 %v502
        %v565 = vunpack.c.l.b16 %v503
        %v566 = vunpack.c.h.b16 %v503
        %v567 = vunpack.c.l.b16 %v504
        %v568 = vunpack.c.h.b16 %v504
        %v569 = vunpack.c.l.b16 %v505
        %v570 = vunpack.c.h.b16 %v505
        %v571 = vunpack.c.l.b16 %v506
        %v572 = vunpack.c.h.b16 %v506
        %v573 = vunpack.c.l.b16 %v507
        %v574 = vunpack.c.h.b16 %v507
        %v575 = vunpack.c.l.b16 %v508
        %v576 = vunpack.c.h.b16 %v508
        %v577 = vunpack.c.l.b16 %v509
        %v578 = vunpack.c.h.b16 %v509
        %v579 = vunpack.c.l.b16 %v510
        %v580 = vunpack.c.h.b16 %v510
        %v581 = vpack.c.b16 %v553, %v549
        %v582 = vpack.c.b16 %v554, %v550
        %v583 = vpack.c.b16 %v555, %v551
        %v584 = vpack.c.b16 %v556, %v552
        %v585 = vpack.c.b16 %v561, %v557
        %v586 = vpack.c.b16 %v562, %v558
        %v587 = vpack.c.b16 %v563, %v559
        %v588 = vpack.c.b16 %v564, %v560
        %v589 = vpack.c.b16 %v569, %v565
        %v590 = vpack.c.b16 %v570, %v566
        %v591 = vpack.c.b16 %v571, %v567
        %v592 = vpack.c.b16 %v572, %v568
        %v593 = vpack.c.b16 %v577, %v573
        %v594 = vpack.c.b16 %v578, %v574
        %v595 = vpack.c.b16 %v579, %v575
        %v596 = vpack.c.b16 %v580, %v576
        %v614 = vsel %vm449, %v494, 0
        %616 = vmatprep.subr.bf16.mxu0 %v582
        %617 = vmatpush1.bf16.msra.mxu0 %v581
        %618 = vmatprep.subr.bf16.mxu0 %v586
        %619 = vmatpush1.bf16.msra.mxu0 %v585
        %620 = vmatprep.subr.bf16.mxu0 %v590
        %621 = vmatpush1.bf16.msra.mxu0 %v589
        %622 = vmatprep.subr.bf16.mxu0 %v594
        %623 = vmatpush1.bf16.msra.mxu0 %v593
        %624 = vmatprep.subr.bf16.mxu0 0
        %625 = vmatpush1.bf16.msra.mxu0 0
        %626 = vmatprep.subr.bf16.mxu0 0
        %627 = vmatpush1.bf16.msra.mxu0 0
        %628 = vmatprep.subr.bf16.mxu0 0
        %629 = vmatpush1.bf16.msra.mxu0 0
        %630 = vmatprep.subr.bf16.mxu0 0
        %631 = vmatpush1.bf16.msra.mxu0 0
        %632 = vmatprep.subr.bf16.mxu0 0
        %633 = vmatpush1.bf16.msra.mxu0 0
        %634 = vmatprep.subr.bf16.mxu0 0
        %635 = vmatpush1.bf16.msra.mxu0 0
        %636 = vmatprep.subr.bf16.mxu0 0
        %637 = vmatpush1.bf16.msra.mxu0 0
        %638 = vmatprep.subr.bf16.mxu0 0
        %639 = vmatpush1.bf16.msra.mxu0 0
        %640 = vmatprep.subr.bf16.mxu0 0
        %641 = vmatpush1.bf16.msra.mxu0 0
        %642 = vmatprep.subr.bf16.mxu0 0
        %643 = vmatpush1.bf16.msra.mxu0 0
        %644 = vmatprep.subr.bf16.mxu0 0
        %645 = vmatpush1.bf16.msra.mxu0 0
        %646 = vmatprep.subr.bf16.mxu0 0
        %647 = vmatpush1.bf16.msra.mxu0 0
        %648 = vmatprep.mubr.bf16.mxu0 0
        %649 = vmatmul.mubr.bf16.gmra.mrb[0].mxu0 %v614
        %v650 = vpop.f32.mrb[0].mxu0
        %v651 = vadd.f32 %v516, %v650
        %v652 = vpop.f32.mrb[0].mxu0
        %v653 = vadd.f32 %v520, %v652
        %v654 = vpop.f32.mrb[0].mxu0
        %v655 = vpop.f32.mrb[0].mxu0
        %656 = vdwg.mxu0
        %657 = vmatprep.subr.bf16.mxu0 %v584
        %658 = vmatpush1.bf16.msra.mxu0 %v583
        %659 = vmatprep.subr.bf16.mxu0 %v588
        %660 = vmatpush1.bf16.msra.mxu0 %v587
        %661 = vmatprep.subr.bf16.mxu0 %v592
        %662 = vmatpush1.bf16.msra.mxu0 %v591
        %663 = vmatprep.subr.bf16.mxu0 %v596
        %664 = vmatpush1.bf16.msra.mxu0 %v595
        %665 = vmatprep.subr.bf16.mxu0 0
        %666 = vmatpush1.bf16.msra.mxu0 0
        %667 = vmatprep.subr.bf16.mxu0 0
        %668 = vmatpush1.bf16.msra.mxu0 0
        %669 = vmatprep.subr.bf16.mxu0 0
        %670 = vmatpush1.bf16.msra.mxu0 0
        %671 = vmatprep.subr.bf16.mxu0 0
        %672 = vmatpush1.bf16.msra.mxu0 0
        %673 = vmatprep.subr.bf16.mxu0 0
        %674 = vmatpush1.bf16.msra.mxu0 0
        %675 = vmatprep.subr.bf16.mxu0 0
        %676 = vmatpush1.bf16.msra.mxu0 0
        %677 = vmatprep.subr.bf16.mxu0 0
        %678 = vmatpush1.bf16.msra.mxu0 0
        %679 = vmatprep.subr.bf16.mxu0 0
        %680 = vmatpush1.bf16.msra.mxu0 0
        %681 = vmatprep.subr.bf16.mxu0 0
        %682 = vmatpush1.bf16.msra.mxu0 0
        %683 = vmatprep.subr.bf16.mxu0 0
        %684 = vmatpush1.bf16.msra.mxu0 0
        %685 = vmatprep.subr.bf16.mxu0 0
        %686 = vmatpush1.bf16.msra.mxu0 0
        %687 = vmatprep.subr.bf16.mxu0 0
        %688 = vmatpush1.bf16.msra.mxu0 0
        %689 = vmatprep.mubr.bf16.mxu0 0
        %690 = vmatmul.mubr.bf16.gmra.mrb[0].mxu0 %v614
        %v691 = vpop.f32.mrb[0].mxu0
        %v692 = vadd.f32 %v524, %v691
        %v693 = vpop.f32.mrb[0].mxu0
        %v694 = vadd.f32 %v528, %v693
        %v695 = vpop.f32.mrb[0].mxu0
        %v696 = vpop.f32.mrb[0].mxu0
        %697 = vdwg.mxu0
        %698 = vst [vmem:[%s337] sm:$0xff] %v651
        %699 = vst [vmem:[%s337 + $0x8] sm:$0xff] %v653
        %700 = vst [vmem:[%s337 + $0x10] sm:$0xff] %v692
        %701 = vst [vmem:[%s337 + $0x18] sm:$0xff] %v694
        %s702 = sand.u32 %s186, 1
        %s703 = scalar_lea.sflag [#allocation4], %s702
        %s704 = sand.u32 %s186, 1
        %s705 = smul.addr %s704, 32
        %s706 = scalar_lea.vmem [#allocation10], %s705
        // Predicated region
        $region65: #{tpu_custom_call.1} parent=47 // pred_check
          %p707 = pneg %p196
        $region66: #{tpu_custom_call.1} parent=47 // pred_check_branch
          %709 = sbr.rel (%p707) target = $region68
        $region67: #{tpu_custom_call.1} parent=47 // pred_region
          %s711 = ssub.s32 512, 512
          %712 = vsyncadd %s703, %s711
          %s713 = smul.addr %s26, 4
          %s714 = smul.addr %s713, 128
          %s715 = scalar_lea.hbm %s7, %s714
          %s717 = sshll.u32 %s706, 4
          %s718 = int_to_ptr.vmem [resolvable:$true] %s717
          %720 = dma.vmem_to_hbm [thread:$0]  %s718, 512, %s715, %s703
        $region68: #{tpu_custom_call.1} parent=47 // pred_fallthru
          _
      $region48: #{tpu_custom_call.1} parent=5 // pred_fallthru
        _
      %p721 = scmp.le.s32.totalorder 2, %s21
      // Predicated region
      $region69: #{tpu_custom_call.1} parent=5 // pred_check
        %p722 = pneg %p721
      $region70: #{tpu_custom_call.1} parent=5 // pred_check_branch
        %724 = sbr.rel (%p722) target = $region72
      $region71: #{tpu_custom_call.1} parent=5 // pred_region
        %s725 = ssub.s32 %s21, 2
        // Predicated region
        $region73: #{tpu_custom_call.1} parent=71 // pred_check
          %p726 = pneg %p202
        $region74: #{tpu_custom_call.1} parent=71 // pred_check_branch
          %728 = sbr.rel (%p726) target = $region76
        $region75: #{tpu_custom_call.1} parent=71 // pred_region
          %s729 = sand.u32 %s187, 1
          %s730 = scalar_lea.sflag [#allocation4], %s729
          %s731 = sand.u32 %s187, 1
          %s732 = smul.addr %s731, 32
          %s733 = scalar_lea.vmem [#allocation10], %s732
          %734 = dma.done %s730, 512
        $region76: #{tpu_custom_call.1} parent=71 // pred_fallthru
          _
      $region72: #{tpu_custom_call.1} parent=5 // pred_fallthru
        _
    $region6: #{tpu_custom_call.1} parent=1 // loop_footer
      %s25 = sadd.s32 1, %s21
    $region7: #{tpu_custom_call.1} parent=1 // loop_footer_branch
      %20 = sbr.rel target = $region3
    $region8: #{tpu_custom_call.1} parent=1 // loop_exit
      _
    %735 = vsyncpa [#allocation3], 1
    %s736 = scalar_lea.sflag [#allocation3], 1
    %737 = vsyncpa %s736, 1
    %738 = vsyncpa [#allocation6], 1
    %739 = vsyncpa [#allocation9], 1
    %740 = vsyncpa [#allocation4], 1
    %s741 = scalar_lea.sflag [#allocation4], 1
    %742 = vsyncpa %s741, 1

</llo_original>
